<compile_context>
chip_gen: v7x
topology: tpu7x:2x2x1
jax: 0.10.0
libtpu: 0.0.40
codegen_flags: <defaults>
</compile_context>

<pallas_src>
import jax
import jax.numpy as jnp
from jax import lax
from jax.experimental import pallas as pl
from jax.experimental.pallas import tpu as pltpu


def _conv1x1_kernel(x_ref, w_ref, b_ref, o_ref):
    # x_ref: (bn, C_in, ts)   w_ref: (C_out, C_in)   b_ref: (C_out, 1)
    # o_ref: (bn, C_out, ts)
    w = w_ref[...]
    b = b_ref[...]
    for i in range(o_ref.shape[0]):  # bn is a small static constant (<= 8)
        acc = jnp.dot(
            w, x_ref[i],
            preferred_element_type=jnp.float32,
            precision=lax.Precision.HIGHEST,
        )
        o_ref[i] = (acc + b).astype(o_ref.dtype)


def conv_out(x_nchw, weight, bias):
    """ConvOut forward (1x1 conv, stride 1, with bias).

    x_nchw : (N, C_in, H, W)      float32
    weight : (C_out, C_in, 1, 1)  float32  (PyTorch conv weight layout)
    bias   : (C_out,)             float32
    returns: (N, C_out, H, W)     float32
    """
    N, C_in, H, W = x_nchw.shape
    C_out = weight.shape[0]
    HW = H * W

    x3 = x_nchw.reshape(N, C_in, HW)      # free reshape, spatial on lane axis
    w_mat = weight.reshape(C_out, C_in)
    b_col = bias.reshape(C_out, 1)

    LANE = 128
    elt = jnp.dtype(x_nchw.dtype).itemsize
    w_elt = jnp.dtype(w_mat.dtype).itemsize

    # ---- generation-aware VMEM budget -------------------------------------
    try:  # v5e/v6e: 128 MiB per core, v7x: 64 MiB per TensorCore.
        vmem_cap = int(pltpu.get_tpu_info().vmem_capacity_bytes)
    except Exception:
        vmem_cap = 64 << 20  # conservative (v7x per-TC)
    working_budget = min(24 << 20, max(vmem_cap // 3, 8 << 20))

    def _step_bytes(bn_, ts_):
        # double-buffered x and out tiles per grid step
        return 2 * bn_ * ts_ * (C_in + C_out) * elt

    # ---- lane (spatial) tile ----------------------------------------------
    MAX_TS = 32768
    if HW <= MAX_TS:
        ts = HW                       # full spatial extent: always legal
    else:
        ts = MAX_TS
        while ts > LANE and _step_bytes(1, ts) > working_budget:
            ts //= 2
        ts = max(LANE, (ts // LANE) * LANE)
    num_s = pl.cdiv(HW, ts)

    # Megacore: ensure >= 2 grid steps when possible (v7x has 2 TensorCores).
    if N * num_s < 2 and HW > LANE:
        ts_half = max(LANE, ((ts + 1) // 2 // LANE) * LANE)
        if ts_half < ts:
            ts = ts_half
            num_s = pl.cdiv(HW, ts)

    # ---- batch tile (amortize per-step overhead on tiny feature maps) ------
    MAX_BN = 8                        # kernel statically unrolls over bn
    TARGET_X_BYTES = 512 * 1024       # aim for >= ~0.5 MiB of x per step
    bn = 1
    while (bn * 2 <= min(N, MAX_BN)
           and bn * ts * C_in * elt < TARGET_X_BYTES
           and _step_bytes(bn * 2, ts) <= working_budget
           and pl.cdiv(N, bn * 2) * num_s >= min(4, N * num_s)):
        bn *= 2

    grid = (pl.cdiv(N, bn), num_s)

    # ---- compiler params ----------------------------------------------------
    total_vmem_est = _step_bytes(bn, ts) + 2 * w_elt * C_out * (C_in + 1)
    compiler_kwargs = dict(dimension_semantics=("parallel", "parallel"))
    if total_vmem_est > (14 << 20):   # v5e scoped default is 16 MiB
        limit_cap = min(48 << 20, max(vmem_cap - (16 << 20), 32 << 20))
        compiler_kwargs["vmem_limit_bytes"] = int(
            min(limit_cap, total_vmem_est + (8 << 20)))

    cost = pl.CostEstimate(
        flops=2 * N * C_out * C_in * HW,
        transcendentals=0,
        bytes_accessed=N * (C_in + C_out) * HW * elt
                       + w_elt * C_out * (C_in + 1),
    )

    out3 = pl.pallas_call(
        _conv1x1_kernel,
        out_shape=jax.ShapeDtypeStruct((N, C_out, HW), x_nchw.dtype),
        grid_spec=pltpu.PrefetchScalarGridSpec(
            num_scalar_prefetch=0,
            grid=grid,
            in_specs=[
                pl.BlockSpec((bn, C_in, ts), lambda b, s: (b, 0, s)),
                pl.BlockSpec((C_out, C_in), lambda b, s: (0, 0)),
                pl.BlockSpec((C_out, 1), lambda b, s: (0, 0)),
            ],
            out_specs=pl.BlockSpec((bn, C_out, ts), lambda b, s: (b, 0, s)),
        ),
        compiler_params=pltpu.CompilerParams(**compiler_kwargs),
        cost_estimate=cost,
    )(x3, w_mat, b_col)

    # Free reshape back to NCHW (layout already matches).
    return out3.reshape(N, C_out, H, W)


def _ref_conv_out(x, weight, bias):
    C_out, C_in = weight.shape[0], weight.shape[1]
    return (jnp.einsum("nchw,oc->nohw", x, weight.reshape(C_out, C_in))
            + bias[None, :, None, None])


if __name__ == "__main__":
    key = jax.random.PRNGKey(0)
    kx, kw, kb, kx2 = jax.random.split(key, 4)

    # Small shapes consistent with the module (dims=2): batch=2, in_ch=4,
    # out_ch=8, spatial=16x16.
    N, C_in, C_out, H, W = 2, 4, 8, 16, 16

    x = jax.random.normal(kx, (N, C_in, H, W), dtype=jnp.float32)

    # Deterministic parameter init mimicking PyTorch Conv2d default.
    fan_in = C_in * 1 * 1
    bound = 1.0 / (fan_in ** 0.5)
    weight = jax.random.uniform(kw, (C_out, C_in, 1, 1), jnp.float32, -bound, bound)
    bias = jax.random.uniform(kb, (C_out,), jnp.float32, -bound, bound)

    out = conv_out(x, weight, bias)
    out = jax.block_until_ready(out)

    ref = _ref_conv_out(x, weight, bias)
    assert out.shape == (N, C_out, H, W)
    assert jnp.allclose(out, ref, atol=1e-5, rtol=1e-5)

    # Extra check: N=1 with a non-multiple-of-128 spatial extent exercises the
    # megacore split (>=2 grid steps) and the ragged last block (no pad/slice).
    x2 = jax.random.normal(kx2, (1, C_in, 13, 13), dtype=jnp.float32)
    out2 = jax.block_until_ready(conv_out(x2, weight, bias))
    ref2 = _ref_conv_out(x2, weight, bias)
    assert out2.shape == (1, C_out, 13, 13)
    assert jnp.allclose(out2, ref2, atol=1e-5, rtol=1e-5)

    print("KERNEL_OK")
</pallas_src>

<mosaic_0001>
module attributes {stable_mosaic.version = 11 : i64} {
  func.func @_conv1x1_kernel(%arg0: i32, %arg1: i32, %arg2: memref<1x4x256xf32, #tpu.memory_space<vmem>>, %arg3: memref<8x4xf32, #tpu.memory_space<vmem>>, %arg4: memref<8x1xf32, #tpu.memory_space<vmem>>, %arg5: memref<1x8x256xf32, #tpu.memory_space<vmem>>) attributes {dimension_semantics = [#tpu.dimension_semantics<parallel>, #tpu.dimension_semantics<parallel>], iteration_bounds = array<i64: 2, 1>, scalar_prefetch = 0 : i64, scratch_operands = 0 : i64, tpu.core_type = #tpu.core_type<tc>, window_params = [{transform_indices = @transform_0, window_bounds = array<i64: 1, 4, 256>}, {pipeline_mode = #tpu.pipeline_mode<synchronous>, transform_indices = @transform_1, window_bounds = array<i64: 8, 4>}, {pipeline_mode = #tpu.pipeline_mode<synchronous>, transform_indices = @transform_2, window_bounds = array<i64: 8, 1>}, {transform_indices = @transform_3, window_bounds = array<i64: 1, 8, 256>}]} {
    %c0 = arith.constant 0 : index
    %c0_0 = arith.constant 0 : index
    %0 = vector.load %arg3[%c0, %c0_0] : memref<8x4xf32, #tpu.memory_space<vmem>>, vector<8x4xf32>
    %c0_1 = arith.constant 0 : index
    %c0_2 = arith.constant 0 : index
    %1 = vector.load %arg4[%c0_1, %c0_2] : memref<8x1xf32, #tpu.memory_space<vmem>>, vector<8x1xf32>
    %c0_3 = arith.constant 0 : index
    %c0_4 = arith.constant 0 : index
    %c0_5 = arith.constant 0 : index
    %2 = vector.load %arg2[%c0_3, %c0_4, %c0_5] : memref<1x4x256xf32, #tpu.memory_space<vmem>>, vector<1x4x256xf32>
    %3 = vector.shape_cast %2 : vector<1x4x256xf32> to vector<4x256xf32>
    %cst = arith.constant dense<0.000000e+00> : vector<8x256xf32>
    %4 = tpu.matmul %0, %3, %cst {dimension_numbers = #tpu.dot_dimension_numbers<[1], [0], [0], [1], [0, 0, 1, 1], [], []>, precision = #tpu.contract_precision<fp32>} : vector<8x4xf32>, vector<4x256xf32>, vector<8x256xf32> -> vector<8x256xf32>
    %5 = vector.broadcast %1 : vector<8x1xf32> to vector<8x256xf32>
    %6 = arith.addf %4, %5 : vector<8x256xf32>
    %c0_6 = arith.constant 0 : index
    %c0_7 = arith.constant 0 : index
    %c0_8 = arith.constant 0 : index
    %7 = vector.load %arg5[%c0_6, %c0_7, %c0_8] : memref<1x8x256xf32, #tpu.memory_space<vmem>>, vector<1x8x256xf32>
    %8 = vector.shape_cast %7 : vector<1x8x256xf32> to vector<8x256xf32>
    %9 = vector.shape_cast %6 : vector<8x256xf32> to vector<1x8x256xf32>
    tpu.vector_store %arg5[%c0_6, %c0_7, %c0_8], %9 {strides = array<i32>} : memref<1x8x256xf32, #tpu.memory_space<vmem>>, vector<1x8x256xf32>,
    return
  }
  func.func @transform_0(%arg0: i32, %arg1: i32) -> (i32, i32, i32) {
    %c0_i32 = arith.constant 0 : i32
    %c0_i32_0 = arith.constant 0 : i32
    return %arg0, %c0_i32, %arg1 : i32, i32, i32
  }
  func.func @transform_1(%arg0: i32, %arg1: i32) -> (i32, i32) {
    %c0_i32 = arith.constant 0 : i32
    %c0_i32_0 = arith.constant 0 : i32
    %c0_i32_1 = arith.constant 0 : i32
    return %c0_i32, %c0_i32_0 : i32, i32
  }
  func.func @transform_2(%arg0: i32, %arg1: i32) -> (i32, i32) {
    %c0_i32 = arith.constant 0 : i32
    %c0_i32_0 = arith.constant 0 : i32
    %c0_i32_1 = arith.constant 0 : i32
    return %c0_i32, %c0_i32_0 : i32, i32
  }
  func.func @transform_3(%arg0: i32, %arg1: i32) -> (i32, i32, i32) {
    %c0_i32 = arith.constant 0 : i32
    %c0_i32_0 = arith.constant 0 : i32
    return %arg0, %c0_i32, %arg1 : i32, i32, i32
  }
}

</mosaic_0001>

<llo_original>
// kernel: tpu_custom_call.1
$region0: #{tpu_custom_call.1}
  #allocation0 [shape = 'u32[]', space=smem, size = 0x4, offset = 0x4, fixed_abs, tag = 'smem constant byte address 0x4 - core index']
  #allocation1 [shape = 'u32[144,128]{1,0:T(1,128)}', space=vmem, size = 0x12000, scoped, tag = 'internal scratch']
  %s0 = inlined_call_operand.vmem [shape: f32[2,4,256], index: 0, kind: input, shape index: {}]
  %s1 = inlined_call_operand.vmem [shape: f32[8,4], index: 1, kind: input, shape index: {}]
  %s2 = inlined_call_operand.vmem [shape: f32[8,1], index: 2, kind: input, shape index: {}]
  %s3 = inlined_call_operand.hbm [shape: f32[2,8,256], index: 3, kind: output, shape index: {}]
  %s4 = sld [smem:[#allocation0]]
  $region45: #{tpu_custom_call.1} parent=0
    _
  %s6 = ssub.s32 1, %s4
  %s7 = scalar_select 0, %s6, %s4
  $region1: #{tpu_custom_call.1} parent=0
    #allocation2 [shape = 'u8[16384]{0}', space=vmem, size = 0x4000, scoped, tag = 'output window, operand 0']
    #allocation3 [shape = 's32[2]{0}', space=sflag, size = 0x8, scoped, tag = 'scoped memory for tpu_custom_call.1']
    %8 = vsyncpa [#allocation3], 0
    %s9 = scalar_lea.sflag [#allocation3], 1
    %10 = vsyncpa %s9, 0
    loop: start=0, step=1, limit=4
    $region2: #{tpu_custom_call.1} parent=1 // loop_pre_header
      _
    $region3: #{tpu_custom_call.1} parent=1 // loop_header
      %s12 = sphi 0, %s16
      %p13 = scmp.ge.s32.totalorder %s12, 4
      %s19 = sphi 0, %s31
      %s20 = sphi 0, %s27
      %s21 = sphi 0, %s19
      %s22 = sphi 0, %s20
      %s23 = sphi 0, %s21
      %s24 = sphi 0, %s22
      %s36 = sphi 0, %s38
      %s39 = sphi 0, %s36
      %s40 = sphi 0, %s39
      %s56 = sphi 0, %s40
      %s60 = sphi 0, %s60
      %s62 = sphi 0, %s60
      %s63 = sphi 0, %s62
      %s77 = sphi 0, %s63
      %s81 = sphi 0, %s81
      %s83 = sphi 0, %s81
      %s84 = sphi 0, %s83
      %s98 = sphi 0, %s84
      %s106 = sphi 0, %s108
      %s109 = sphi 0, %s106
      %s110 = sphi 0, %s109
      %s126 = sphi 0, %s110
    $region4: #{tpu_custom_call.1} parent=1 // loop_header_branch
      %15 = sbr.rel (%p13) target = $region8
    $region5: #{tpu_custom_call.1} parent=1 // loop_body
      %s17 = ssub.s32 %s12, 1
      %s18 = ssub.s32 %s12, 2
      %s25 = sadd.s32 1, %s20
      %p26 = scmp.ge.s32.totalorder %s25, 1
      %s27 = scalar_select %p26, 0, %s25
      %s28 = sadd.s32 1, %s19
      %s29 = scalar_select %p26, %s28, %s19
      %p30 = scmp.ge.s32.totalorder %s29, 2
      %s31 = scalar_select %p30, 0, %s29
      %s32 = ssub.s32 %s19, %s31
      %s33 = ssub.s32 %s20, %s27
      %s34 = sor.u32 %s32, %s33
      %p35 = scmp.eq.s32.totalorder %s34, 0
      %s37 = sadd.s32 %s36, 1
      %s38 = scalar_select %p35, %s36, %s37
      %p41 = pneg %p35
      %p42 = scmp.eq.s32.totalorder %s12, 1
      %p43 = por %p41, %p42
      %p44 = scmp.ne.s32.totalorder %s36, %s39
      %p45 = scmp.eq.s32.totalorder %s12, 0
      %p46 = por %p44, %p45
      %p47 = scmp.ne.s32.totalorder %s36, %s39
      %p48 = scmp.eq.s32.totalorder %s17, 1
      %p49 = por %p47, %p48
      %p50 = scmp.ne.s32.totalorder %s39, %s40
      %p51 = scmp.eq.s32.totalorder %s17, 0
      %p52 = por %p50, %p51
      %p53 = scmp.ne.s32.totalorder %s39, %s40
      %p54 = scmp.eq.s32.totalorder %s18, 1
      %p55 = por %p53, %p54
      %p57 = scmp.ne.s32.totalorder %s40, %s56
      %p58 = scmp.eq.s32.totalorder %s18, 0
      %p59 = por %p57, %p58
      %s61 = sadd.s32 %s60, 1
      %p64 = scmp.eq.s32.totalorder %s12, 1
      %p65 = scmp.ne.s32.totalorder %s60, %s62
      %p66 = scmp.eq.s32.totalorder %s12, 0
      %p67 = por %p65, %p66
      %p68 = scmp.ne.s32.totalorder %s60, %s62
      %p69 = scmp.eq.s32.totalorder %s17, 1
      %p70 = por %p68, %p69
      %p71 = scmp.ne.s32.totalorder %s62, %s63
      %p72 = scmp.eq.s32.totalorder %s17, 0
      %p73 = por %p71, %p72
      %p74 = scmp.ne.s32.totalorder %s62, %s63
      %p75 = scmp.eq.s32.totalorder %s18, 1
      %p76 = por %p74, %p75
      %p78 = scmp.ne.s32.totalorder %s63, %s77
      %p79 = scmp.eq.s32.totalorder %s18, 0
      %p80 = por %p78, %p79
      %s82 = sadd.s32 %s81, 1
      %p85 = scmp.eq.s32.totalorder %s12, 1
      %p86 = scmp.ne.s32.totalorder %s81, %s83
      %p87 = scmp.eq.s32.totalorder %s12, 0
      %p88 = por %p86, %p87
      %p89 = scmp.ne.s32.totalorder %s81, %s83
      %p90 = scmp.eq.s32.totalorder %s17, 1
      %p91 = por %p89, %p90
      %p92 = scmp.ne.s32.totalorder %s83, %s84
      %p93 = scmp.eq.s32.totalorder %s17, 0
      %p94 = por %p92, %p93
      %p95 = scmp.ne.s32.totalorder %s83, %s84
      %p96 = scmp.eq.s32.totalorder %s18, 1
      %p97 = por %p95, %p96
      %p99 = scmp.ne.s32.totalorder %s84, %s98
      %p100 = scmp.eq.s32.totalorder %s18, 0
      %p101 = por %p99, %p100
      %s102 = ssub.s32 %s19, %s31
      %s103 = ssub.s32 %s20, %s27
      %s104 = sor.u32 %s102, %s103
      %p105 = scmp.eq.s32.totalorder %s104, 0
      %s107 = sadd.s32 %s106, 1
      %s108 = scalar_select %p105, %s106, %s107
      %p111 = pneg %p105
      %p112 = scmp.eq.s32.totalorder %s12, 1
      %p113 = por %p111, %p112
      %p114 = scmp.ne.s32.totalorder %s106, %s109
      %p115 = scmp.eq.s32.totalorder %s12, 0
      %p116 = por %p114, %p115
      %p117 = scmp.ne.s32.totalorder %s106, %s109
      %p118 = scmp.eq.s32.totalorder %s17, 1
      %p119 = por %p117, %p118
      %p120 = scmp.ne.s32.totalorder %s109, %s110
      %p121 = scmp.eq.s32.totalorder %s17, 0
      %p122 = por %p120, %p121
      %p123 = scmp.ne.s32.totalorder %s109, %s110
      %p124 = scmp.eq.s32.totalorder %s18, 1
      %p125 = por %p123, %p124
      %p127 = scmp.ne.s32.totalorder %s110, %s126
      %p128 = scmp.eq.s32.totalorder %s18, 0
      %p129 = por %p127, %p128
      %p130 = scmp.le.s32.totalorder 1, %s12
      %p131 = scmp.lt.s32.totalorder %s12, 3
      %p132 = pnand %p130, %p131
      %p133 = pneg %p132
      // Predicated region
      $region9: #{tpu_custom_call.1} parent=5 // pred_check
        _
      $region10: #{tpu_custom_call.1} parent=5 // pred_check_branch
        %135 = sbr.rel (%p132) target = $region12
      $region11: #{tpu_custom_call.1} parent=5 // pred_region
        %s136 = ssub.s32 %s12, 1
        // Predicated region
        $region13: #{tpu_custom_call.1} parent=11 // pred_check
          %p137 = pneg %p73
        $region14: #{tpu_custom_call.1} parent=11 // pred_check_branch
          %139 = sbr.rel (%p137) target = $region16
        $region15: #{tpu_custom_call.1} parent=11 // pred_region
          _
        $region16: #{tpu_custom_call.1} parent=11 // pred_fallthru
          _
        // Predicated region
        $region17: #{tpu_custom_call.1} parent=11 // pred_check
          %p140 = pneg %p94
        $region18: #{tpu_custom_call.1} parent=11 // pred_check_branch
          %142 = sbr.rel (%p140) target = $region20
        $region19: #{tpu_custom_call.1} parent=11 // pred_region
          _
        $region20: #{tpu_custom_call.1} parent=11 // pred_fallthru
          _
      $region12: #{tpu_custom_call.1} parent=5 // pred_fallthru
        _
      %p143 = scmp.lt.s32.totalorder %s12, 2
      // Predicated region
      $region21: #{tpu_custom_call.1} parent=5 // pred_check
        %p144 = pneg %p143
      $region22: #{tpu_custom_call.1} parent=5 // pred_check_branch
        %146 = sbr.rel (%p144) target = $region24
      $region23: #{tpu_custom_call.1} parent=5 // pred_region
        // Predicated region
        $region25: #{tpu_custom_call.1} parent=23 // pred_check
          %p147 = pneg %p46
        $region26: #{tpu_custom_call.1} parent=23 // pred_check_branch
          %149 = sbr.rel (%p147) target = $region28
        $region27: #{tpu_custom_call.1} parent=23 // pred_region
          %s150 = smul.u32 2, %s20
          %p151 = scmp.lt.s32.totalorder %s19, 1
          %s152 = scalar_select %p151, %s19, 1
          %p153 = scmp.lt.s32.totalorder %s150, 1
          %s154 = scalar_select %p153, %s150, 1
          %s155 = smul.addr %s152, 2
          %s156 = sadd.s32 %s154, %s155
          %s157 = smul.addr %s156, 4
          %s158 = scalar_lea.vmem %s0, %s157
          %s159 = smul.u32 2, %s20
        $region28: #{tpu_custom_call.1} parent=23 // pred_fallthru
          _
      $region24: #{tpu_custom_call.1} parent=5 // pred_fallthru
        _
      %p160 = scmp.le.s32.totalorder 1, %s12
      %p161 = scmp.lt.s32.totalorder %s12, 3
      %p162 = pnand %p160, %p161
      %p163 = pneg %p162
      // Predicated region
      $region29: #{tpu_custom_call.1} parent=5 // pred_check
        _
      $region30: #{tpu_custom_call.1} parent=5 // pred_check_branch
        %165 = sbr.rel (%p162) target = $region32
      $region31: #{tpu_custom_call.1} parent=5 // pred_region
        %s166 = ssub.s32 %s12, 1
        %s167 = smul.u32 2, %s22
        %p168 = scmp.lt.s32.totalorder %s21, 1
        %s169 = scalar_select %p168, %s21, 1
        %p170 = scmp.lt.s32.totalorder %s167, 1
        %s171 = scalar_select %p170, %s167, 1
        %s172 = smul.addr %s169, 2
        %s173 = sadd.s32 %s171, %s172
        %s174 = smul.addr %s173, 4
        %s175 = scalar_lea.vmem %s0, %s174
        %p176 = pneg %p52
        %p177 = pneg %p49
        %p178 = pneg %p73
        %p179 = pneg %p70
        %p180 = pneg %p94
        %p181 = pneg %p91
        %p182 = pneg %p122
        %p183 = pneg %p119
        %s184 = sand.u32 %s109, 1
        %s185 = scalar_lea.sflag [#allocation3], %s184
        %s186 = sand.u32 %s109, 1
        %s187 = smul.addr %s186, 16
        %s188 = scalar_lea.vmem [#allocation2], %s187
        %s189 = smul.u32 2, %s22
        %p190 = scmp.lt.s32.totalorder %s21, 1
        %s191 = scalar_select %p190, %s21, 1
        %p192 = scmp.lt.s32.totalorder %s189, 1
        %s193 = scalar_select %p192, %s189, 1
        %s194 = smul.addr %s191, 2
        %s195 = sadd.s32 %s193, %s194
        %s196 = smul.addr %s195, 4
        %s197 = scalar_lea.vmem %s0, %s196
        %s198 = smul.u32 2, %s22
        %s199 = smul.u32 2, %s22
        %v200 = vld [vmem:[%s1] sm:$0xff]
        %v201 = vld [vmem:[%s2] sm:$0xff]
        %v202 = vld [vmem:[%s197] sm:$0xff]
        %204 = vset.pattern.permute.xlu0 0
        %205 = vperm.xlu0 %204, %v201
        %v206 = vpop.permute.xlu0 %205
        %v209 = vcombine.high %v202, %v202
        %vm210 = vcmask 31744
        %v212 = vsel %vm210, %v200, 0
        %vm214 = vcmask 1043456
        %v215 = vsel %vm214, %v202, 0
        %v217 = vsel %vm214, %v209, 0
        %v219 = vand.u32 %v217, 4294901760
        %220 = vmatprep.subr.mxu0 %v219
        %v221 = vand.u32 %v215, 4294901760
        %222 = vmatpush1.msra.mxu0 %v221
        %223 = vmatprep.subr.mxu0 0.0
        %224 = vmatpush1.msra.mxu0 0.0
        %225 = vmatprep.subr.mxu0 0.0
        %226 = vmatpush1.msra.mxu0 0.0
        %227 = vmatprep.subr.mxu0 0.0
        %228 = vmatpush1.msra.mxu0 0.0
        %229 = vmatprep.subr.mxu0 0.0
        %230 = vmatpush1.msra.mxu0 0.0
        %231 = vmatprep.subr.mxu0 0.0
        %232 = vmatpush1.msra.mxu0 0.0
        %233 = vmatprep.subr.mxu0 0.0
        %234 = vmatpush1.msra.mxu0 0.0
        %235 = vmatprep.subr.mxu0 0.0
        %236 = vmatpush1.msra.mxu0 0.0
        %237 = vmatprep.subr.mxu0 0.0
        %238 = vmatpush1.msra.mxu0 0.0
        %239 = vmatprep.subr.mxu0 0.0
        %240 = vmatpush1.msra.mxu0 0.0
        %241 = vmatprep.subr.mxu0 0.0
        %242 = vmatpush1.msra.mxu0 0.0
        %243 = vmatprep.subr.mxu0 0.0
        %244 = vmatpush1.msra.mxu0 0.0
        %245 = vmatprep.subr.mxu0 0.0
        %246 = vmatpush1.msra.mxu0 0.0
        %247 = vmatprep.subr.mxu0 0.0
        %248 = vmatpush1.msra.mxu0 0.0
        %249 = vmatprep.subr.mxu0 0.0
        %250 = vmatpush1.msra.mxu0 0.0
        %251 = vmatprep.subr.mxu0 0.0
        %252 = vmatpush1.msra.mxu0 0.0
        %253 = vmatprep.subr.mxu0 0.0
        %254 = vmatpush1.msra.mxu0 0.0
        %255 = vmatprep.subr.mxu0 0.0
        %256 = vmatpush1.msra.mxu0 0.0
        %257 = vmatprep.subr.mxu0 0.0
        %258 = vmatpush1.msra.mxu0 0.0
        %259 = vmatprep.subr.mxu0 0.0
        %260 = vmatpush1.msra.mxu0 0.0
        %261 = vmatprep.subr.mxu0 0.0
        %262 = vmatpush1.msra.mxu0 0.0
        %263 = vmatprep.subr.mxu0 0.0
        %264 = vmatpush1.msra.mxu0 0.0
        %265 = vmatprep.subr.mxu0 0.0
        %266 = vmatpush1.msra.mxu0 0.0
        %267 = vmatprep.subr.mxu0 0.0
        %268 = vmatpush1.msra.mxu0 0.0
        %269 = vmatprep.subr.mxu0 0.0
        %270 = vmatpush1.msra.mxu0 0.0
        %271 = vmatprep.subr.mxu0 0.0
        %272 = vmatpush1.msra.mxu0 0.0
        %273 = vmatprep.subr.mxu0 0.0
        %274 = vmatpush1.msra.mxu0 0.0
        %275 = vmatprep.subr.mxu0 0.0
        %276 = vmatpush1.msra.mxu0 0.0
        %277 = vmatprep.subr.mxu0 0.0
        %278 = vmatpush1.msra.mxu0 0.0
        %279 = vmatprep.subr.mxu0 0.0
        %280 = vmatpush1.msra.mxu0 0.0
        %281 = vmatprep.subr.mxu0 0.0
        %282 = vmatpush1.msra.mxu0 0.0
        %283 = vmatprep.subr.mxu0 0.0
        %284 = vmatpush1.msra.mxu0 0.0
        %285 = vmatprep.mubr.f32.mxu0 0.0
        %v286 = vand.u32 %v212, 4294901760
        %v287 = vsub.f32 %v212, %v286
        %v288 = vand.u32 %v287, 4294901760
        %v289 = vsub.f32 %v287, %v288
        %v290 = vand.u32 %v289, 4294901760
        %291 = vmatmul.mubr.f32.gmra.mrb[0].mxu0 %v290
        %v292 = vpop.f32.mrb[0].mxu0
        %v293 = vadd.f32 %v206, %v292
        %v294 = vpop.f32.mrb[0].mxu0
        %v295 = vadd.f32 %v206, %v294
        %296 = vdwg.mxu0
        %v297 = vand.u32 %v217, 4294901760
        %v298 = vsub.f32 %v217, %v297
        %v299 = vand.u32 %v298, 4294901760
        %v300 = vsub.f32 %v298, %v299
        %v301 = vand.u32 %v300, 4294901760
        %302 = vmatprep.subr.mxu0 %v301
        %v303 = vand.u32 %v215, 4294901760
        %v304 = vsub.f32 %v215, %v303
        %v305 = vand.u32 %v304, 4294901760
        %v306 = vsub.f32 %v304, %v305
        %v307 = vand.u32 %v306, 4294901760
        %308 = vmatpush1.msra.mxu0 %v307
        %309 = vmatprep.subr.mxu0 0.0
        %310 = vmatpush1.msra.mxu0 0.0
        %311 = vmatprep.subr.mxu0 0.0
        %312 = vmatpush1.msra.mxu0 0.0
        %313 = vmatprep.subr.mxu0 0.0
        %314 = vmatpush1.msra.mxu0 0.0
        %315 = vmatprep.subr.mxu0 0.0
        %316 = vmatpush1.msra.mxu0 0.0
        %317 = vmatprep.subr.mxu0 0.0
        %318 = vmatpush1.msra.mxu0 0.0
        %319 = vmatprep.subr.mxu0 0.0
        %320 = vmatpush1.msra.mxu0 0.0
        %321 = vmatprep.subr.mxu0 0.0
        %322 = vmatpush1.msra.mxu0 0.0
        %323 = vmatprep.subr.mxu0 0.0
        %324 = vmatpush1.msra.mxu0 0.0
        %325 = vmatprep.subr.mxu0 0.0
        %326 = vmatpush1.msra.mxu0 0.0
        %327 = vmatprep.subr.mxu0 0.0
        %328 = vmatpush1.msra.mxu0 0.0
        %329 = vmatprep.subr.mxu0 0.0
        %330 = vmatpush1.msra.mxu0 0.0
        %331 = vmatprep.subr.mxu0 0.0
        %332 = vmatpush1.msra.mxu0 0.0
        %333 = vmatprep.subr.mxu0 0.0
        %334 = vmatpush1.msra.mxu0 0.0
        %335 = vmatprep.subr.mxu0 0.0
        %336 = vmatpush1.msra.mxu0 0.0
        %337 = vmatprep.subr.mxu0 0.0
        %338 = vmatpush1.msra.mxu0 0.0
        %339 = vmatprep.subr.mxu0 0.0
        %340 = vmatpush1.msra.mxu0 0.0
        %341 = vmatprep.subr.mxu0 0.0
        %342 = vmatpush1.msra.mxu0 0.0
        %343 = vmatprep.subr.mxu0 0.0
        %344 = vmatpush1.msra.mxu0 0.0
        %345 = vmatprep.subr.mxu0 0.0
        %346 = vmatpush1.msra.mxu0 0.0
        %347 = vmatprep.subr.mxu0 0.0
        %348 = vmatpush1.msra.mxu0 0.0
        %349 = vmatprep.subr.mxu0 0.0
        %350 = vmatpush1.msra.mxu0 0.0
        %351 = vmatprep.subr.mxu0 0.0
        %352 = vmatpush1.msra.mxu0 0.0
        %353 = vmatprep.subr.mxu0 0.0
        %354 = vmatpush1.msra.mxu0 0.0
        %355 = vmatprep.subr.mxu0 0.0
        %356 = vmatpush1.msra.mxu0 0.0
        %357 = vmatprep.subr.mxu0 0.0
        %358 = vmatpush1.msra.mxu0 0.0
        %359 = vmatprep.subr.mxu0 0.0
        %360 = vmatpush1.msra.mxu0 0.0
        %361 = vmatprep.subr.mxu0 0.0
        %362 = vmatpush1.msra.mxu0 0.0
        %363 = vmatprep.subr.mxu0 0.0
        %364 = vmatpush1.msra.mxu0 0.0
        %365 = vmatprep.subr.mxu0 0.0
        %366 = vmatpush1.msra.mxu0 0.0
        %367 = vmatprep.subr.mxu0 0.0
        %368 = vmatpush1.msra.mxu0 0.0
        %369 = vmatprep.subr.mxu0 0.0
        %370 = vmatpush1.msra.mxu0 0.0
        %371 = vmatprep.mubr.f32.mxu0 0.0
        %v372 = vand.u32 %v212, 4294901760
        %373 = vmatmul.mubr.f32.gmra.mrb[0].mxu0 %v372
        %v374 = vpop.f32.mrb[0].mxu0
        %v375 = vadd.f32 %v293, %v374
        %v376 = vpop.f32.mrb[0].mxu0
        %v377 = vadd.f32 %v295, %v376
        %378 = vdwg.mxu0
        %v379 = vand.u32 %v217, 4294901760
        %v380 = vsub.f32 %v217, %v379
        %381 = vmatprep.subr.mxu0 %v380
        %v382 = vand.u32 %v215, 4294901760
        %v383 = vsub.f32 %v215, %v382
        %384 = vmatpush1.msra.mxu0 %v383
        %385 = vmatprep.subr.mxu0 0.0
        %386 = vmatpush1.msra.mxu0 0.0
        %387 = vmatprep.subr.mxu0 0.0
        %388 = vmatpush1.msra.mxu0 0.0
        %389 = vmatprep.subr.mxu0 0.0
        %390 = vmatpush1.msra.mxu0 0.0
        %391 = vmatprep.subr.mxu0 0.0
        %392 = vmatpush1.msra.mxu0 0.0
        %393 = vmatprep.subr.mxu0 0.0
        %394 = vmatpush1.msra.mxu0 0.0
        %395 = vmatprep.subr.mxu0 0.0
        %396 = vmatpush1.msra.mxu0 0.0
        %397 = vmatprep.subr.mxu0 0.0
        %398 = vmatpush1.msra.mxu0 0.0
        %399 = vmatprep.subr.mxu0 0.0
        %400 = vmatpush1.msra.mxu0 0.0
        %401 = vmatprep.subr.mxu0 0.0
        %402 = vmatpush1.msra.mxu0 0.0
        %403 = vmatprep.subr.mxu0 0.0
        %404 = vmatpush1.msra.mxu0 0.0
        %405 = vmatprep.subr.mxu0 0.0
        %406 = vmatpush1.msra.mxu0 0.0
        %407 = vmatprep.subr.mxu0 0.0
        %408 = vmatpush1.msra.mxu0 0.0
        %409 = vmatprep.subr.mxu0 0.0
        %410 = vmatpush1.msra.mxu0 0.0
        %411 = vmatprep.subr.mxu0 0.0
        %412 = vmatpush1.msra.mxu0 0.0
        %413 = vmatprep.subr.mxu0 0.0
        %414 = vmatpush1.msra.mxu0 0.0
        %415 = vmatprep.subr.mxu0 0.0
        %416 = vmatpush1.msra.mxu0 0.0
        %417 = vmatprep.subr.mxu0 0.0
        %418 = vmatpush1.msra.mxu0 0.0
        %419 = vmatprep.subr.mxu0 0.0
        %420 = vmatpush1.msra.mxu0 0.0
        %421 = vmatprep.subr.mxu0 0.0
        %422 = vmatpush1.msra.mxu0 0.0
        %423 = vmatprep.subr.mxu0 0.0
        %424 = vmatpush1.msra.mxu0 0.0
        %425 = vmatprep.subr.mxu0 0.0
        %426 = vmatpush1.msra.mxu0 0.0
        %427 = vmatprep.subr.mxu0 0.0
        %428 = vmatpush1.msra.mxu0 0.0
        %429 = vmatprep.subr.mxu0 0.0
        %430 = vmatpush1.msra.mxu0 0.0
        %431 = vmatprep.subr.mxu0 0.0
        %432 = vmatpush1.msra.mxu0 0.0
        %433 = vmatprep.subr.mxu0 0.0
        %434 = vmatpush1.msra.mxu0 0.0
        %435 = vmatprep.subr.mxu0 0.0
        %436 = vmatpush1.msra.mxu0 0.0
        %437 = vmatprep.subr.mxu0 0.0
        %438 = vmatpush1.msra.mxu0 0.0
        %439 = vmatprep.subr.mxu0 0.0
        %440 = vmatpush1.msra.mxu0 0.0
        %441 = vmatprep.subr.mxu0 0.0
        %442 = vmatpush1.msra.mxu0 0.0
        %443 = vmatprep.subr.mxu0 0.0
        %444 = vmatpush1.msra.mxu0 0.0
        %445 = vmatprep.subr.mxu0 0.0
        %446 = vmatpush1.msra.mxu0 0.0
        %447 = vmatprep.mubr.f32.mxu0 0.0
        %v448 = vand.u32 %v212, 4294901760
        %v449 = vsub.f32 %v212, %v448
        %450 = vmatmul.mubr.f32.gmra.mrb[0].mxu0 %v449
        %v451 = vpop.f32.mrb[0].mxu0
        %v452 = vadd.f32 %v375, %v451
        %v453 = vpop.f32.mrb[0].mxu0
        %v454 = vadd.f32 %v377, %v453
        %455 = vdwg.mxu0
        %v456 = vand.u32 %v217, 4294901760
        %457 = vmatprep.subr.mxu0 %v456
        %v458 = vand.u32 %v215, 4294901760
        %459 = vmatpush1.msra.mxu0 %v458
        %460 = vmatprep.subr.mxu0 0.0
        %461 = vmatpush1.msra.mxu0 0.0
        %462 = vmatprep.subr.mxu0 0.0
        %463 = vmatpush1.msra.mxu0 0.0
        %464 = vmatprep.subr.mxu0 0.0
        %465 = vmatpush1.msra.mxu0 0.0
        %466 = vmatprep.subr.mxu0 0.0
        %467 = vmatpush1.msra.mxu0 0.0
        %468 = vmatprep.subr.mxu0 0.0
        %469 = vmatpush1.msra.mxu0 0.0
        %470 = vmatprep.subr.mxu0 0.0
        %471 = vmatpush1.msra.mxu0 0.0
        %472 = vmatprep.subr.mxu0 0.0
        %473 = vmatpush1.msra.mxu0 0.0
        %474 = vmatprep.subr.mxu0 0.0
        %475 = vmatpush1.msra.mxu0 0.0
        %476 = vmatprep.subr.mxu0 0.0
        %477 = vmatpush1.msra.mxu0 0.0
        %478 = vmatprep.subr.mxu0 0.0
        %479 = vmatpush1.msra.mxu0 0.0
        %480 = vmatprep.subr.mxu0 0.0
        %481 = vmatpush1.msra.mxu0 0.0
        %482 = vmatprep.subr.mxu0 0.0
        %483 = vmatpush1.msra.mxu0 0.0
        %484 = vmatprep.subr.mxu0 0.0
        %485 = vmatpush1.msra.mxu0 0.0
        %486 = vmatprep.subr.mxu0 0.0
        %487 = vmatpush1.msra.mxu0 0.0
        %488 = vmatprep.subr.mxu0 0.0
        %489 = vmatpush1.msra.mxu0 0.0
        %490 = vmatprep.subr.mxu0 0.0
        %491 = vmatpush1.msra.mxu0 0.0
        %492 = vmatprep.subr.mxu0 0.0
        %493 = vmatpush1.msra.mxu0 0.0
        %494 = vmatprep.subr.mxu0 0.0
        %495 = vmatpush1.msra.mxu0 0.0
        %496 = vmatprep.subr.mxu0 0.0
        %497 = vmatpush1.msra.mxu0 0.0
        %498 = vmatprep.subr.mxu0 0.0
        %499 = vmatpush1.msra.mxu0 0.0
        %500 = vmatprep.subr.mxu0 0.0
        %501 = vmatpush1.msra.mxu0 0.0
        %502 = vmatprep.subr.mxu0 0.0
        %503 = vmatpush1.msra.mxu0 0.0
        %504 = vmatprep.subr.mxu0 0.0
        %505 = vmatpush1.msra.mxu0 0.0
        %506 = vmatprep.subr.mxu0 0.0
        %507 = vmatpush1.msra.mxu0 0.0
        %508 = vmatprep.subr.mxu0 0.0
        %509 = vmatpush1.msra.mxu0 0.0
        %510 = vmatprep.subr.mxu0 0.0
        %511 = vmatpush1.msra.mxu0 0.0
        %512 = vmatprep.subr.mxu0 0.0
        %513 = vmatpush1.msra.mxu0 0.0
        %514 = vmatprep.subr.mxu0 0.0
        %515 = vmatpush1.msra.mxu0 0.0
        %516 = vmatprep.subr.mxu0 0.0
        %517 = vmatpush1.msra.mxu0 0.0
        %518 = vmatprep.subr.mxu0 0.0
        %519 = vmatpush1.msra.mxu0 0.0
        %520 = vmatprep.subr.mxu0 0.0
        %521 = vmatpush1.msra.mxu0 0.0
        %522 = vmatprep.mubr.f32.mxu0 0.0
        %v523 = vand.u32 %v212, 4294901760
        %v524 = vsub.f32 %v212, %v523
        %v525 = vand.u32 %v524, 4294901760
        %526 = vmatmul.mubr.f32.gmra.mrb[0].mxu0 %v525
        %v527 = vpop.f32.mrb[0].mxu0
        %v528 = vadd.f32 %v452, %v527
        %v529 = vpop.f32.mrb[0].mxu0
        %v530 = vadd.f32 %v454, %v529
        %531 = vdwg.mxu0
        %v532 = vand.u32 %v217, 4294901760
        %v533 = vsub.f32 %v217, %v532
        %v534 = vand.u32 %v533, 4294901760
        %535 = vmatprep.subr.mxu0 %v534
        %v536 = vand.u32 %v215, 4294901760
        %v537 = vsub.f32 %v215, %v536
        %v538 = vand.u32 %v537, 4294901760
        %539 = vmatpush1.msra.mxu0 %v538
        %540 = vmatprep.subr.mxu0 0.0
        %541 = vmatpush1.msra.mxu0 0.0
        %542 = vmatprep.subr.mxu0 0.0
        %543 = vmatpush1.msra.mxu0 0.0
        %544 = vmatprep.subr.mxu0 0.0
        %545 = vmatpush1.msra.mxu0 0.0
        %546 = vmatprep.subr.mxu0 0.0
        %547 = vmatpush1.msra.mxu0 0.0
        %548 = vmatprep.subr.mxu0 0.0
        %549 = vmatpush1.msra.mxu0 0.0
        %550 = vmatprep.subr.mxu0 0.0
        %551 = vmatpush1.msra.mxu0 0.0
        %552 = vmatprep.subr.mxu0 0.0
        %553 = vmatpush1.msra.mxu0 0.0
        %554 = vmatprep.subr.mxu0 0.0
        %555 = vmatpush1.msra.mxu0 0.0
        %556 = vmatprep.subr.mxu0 0.0
        %557 = vmatpush1.msra.mxu0 0.0
        %558 = vmatprep.subr.mxu0 0.0
        %559 = vmatpush1.msra.mxu0 0.0
        %560 = vmatprep.subr.mxu0 0.0
        %561 = vmatpush1.msra.mxu0 0.0
        %562 = vmatprep.subr.mxu0 0.0
        %563 = vmatpush1.msra.mxu0 0.0
        %564 = vmatprep.subr.mxu0 0.0
        %565 = vmatpush1.msra.mxu0 0.0
        %566 = vmatprep.subr.mxu0 0.0
        %567 = vmatpush1.msra.mxu0 0.0
        %568 = vmatprep.subr.mxu0 0.0
        %569 = vmatpush1.msra.mxu0 0.0
        %570 = vmatprep.subr.mxu0 0.0
        %571 = vmatpush1.msra.mxu0 0.0
        %572 = vmatprep.subr.mxu0 0.0
        %573 = vmatpush1.msra.mxu0 0.0
        %574 = vmatprep.subr.mxu0 0.0
        %575 = vmatpush1.msra.mxu0 0.0
        %576 = vmatprep.subr.mxu0 0.0
        %577 = vmatpush1.msra.mxu0 0.0
        %578 = vmatprep.subr.mxu0 0.0
        %579 = vmatpush1.msra.mxu0 0.0
        %580 = vmatprep.subr.mxu0 0.0
        %581 = vmatpush1.msra.mxu0 0.0
        %582 = vmatprep.subr.mxu0 0.0
        %583 = vmatpush1.msra.mxu0 0.0
        %584 = vmatprep.subr.mxu0 0.0
        %585 = vmatpush1.msra.mxu0 0.0
        %586 = vmatprep.subr.mxu0 0.0
        %587 = vmatpush1.msra.mxu0 0.0
        %588 = vmatprep.subr.mxu0 0.0
        %589 = vmatpush1.msra.mxu0 0.0
        %590 = vmatprep.subr.mxu0 0.0
        %591 = vmatpush1.msra.mxu0 0.0
        %592 = vmatprep.subr.mxu0 0.0
        %593 = vmatpush1.msra.mxu0 0.0
        %594 = vmatprep.subr.mxu0 0.0
        %595 = vmatpush1.msra.mxu0 0.0
        %596 = vmatprep.subr.mxu0 0.0
        %597 = vmatpush1.msra.mxu0 0.0
        %598 = vmatprep.subr.mxu0 0.0
        %599 = vmatpush1.msra.mxu0 0.0
        %600 = vmatprep.subr.mxu0 0.0
        %601 = vmatpush1.msra.mxu0 0.0
        %602 = vmatprep.mubr.f32.mxu0 0.0
        %v603 = vand.u32 %v212, 4294901760
        %604 = vmatmul.mubr.f32.gmra.mrb[0].mxu0 %v603
        %v605 = vpop.f32.mrb[0].mxu0
        %v606 = vadd.f32 %v528, %v605
        %v607 = vpop.f32.mrb[0].mxu0
        %v608 = vadd.f32 %v530, %v607
        %609 = vdwg.mxu0
        %v610 = vand.u32 %v217, 4294901760
        %611 = vmatprep.subr.mxu0 %v610
        %v612 = vand.u32 %v215, 4294901760
        %613 = vmatpush1.msra.mxu0 %v612
        %614 = vmatprep.subr.mxu0 0.0
        %615 = vmatpush1.msra.mxu0 0.0
        %616 = vmatprep.subr.mxu0 0.0
        %617 = vmatpush1.msra.mxu0 0.0
        %618 = vmatprep.subr.mxu0 0.0
        %619 = vmatpush1.msra.mxu0 0.0
        %620 = vmatprep.subr.mxu0 0.0
        %621 = vmatpush1.msra.mxu0 0.0
        %622 = vmatprep.subr.mxu0 0.0
        %623 = vmatpush1.msra.mxu0 0.0
        %624 = vmatprep.subr.mxu0 0.0
        %625 = vmatpush1.msra.mxu0 0.0
        %626 = vmatprep.subr.mxu0 0.0
        %627 = vmatpush1.msra.mxu0 0.0
        %628 = vmatprep.subr.mxu0 0.0
        %629 = vmatpush1.msra.mxu0 0.0
        %630 = vmatprep.subr.mxu0 0.0
        %631 = vmatpush1.msra.mxu0 0.0
        %632 = vmatprep.subr.mxu0 0.0
        %633 = vmatpush1.msra.mxu0 0.0
        %634 = vmatprep.subr.mxu0 0.0
        %635 = vmatpush1.msra.mxu0 0.0
        %636 = vmatprep.subr.mxu0 0.0
        %637 = vmatpush1.msra.mxu0 0.0
        %638 = vmatprep.subr.mxu0 0.0
        %639 = vmatpush1.msra.mxu0 0.0
        %640 = vmatprep.subr.mxu0 0.0
        %641 = vmatpush1.msra.mxu0 0.0
        %642 = vmatprep.subr.mxu0 0.0
        %643 = vmatpush1.msra.mxu0 0.0
        %644 = vmatprep.subr.mxu0 0.0
        %645 = vmatpush1.msra.mxu0 0.0
        %646 = vmatprep.subr.mxu0 0.0
        %647 = vmatpush1.msra.mxu0 0.0
        %648 = vmatprep.subr.mxu0 0.0
        %649 = vmatpush1.msra.mxu0 0.0
        %650 = vmatprep.subr.mxu0 0.0
        %651 = vmatpush1.msra.mxu0 0.0
        %652 = vmatprep.subr.mxu0 0.0
        %653 = vmatpush1.msra.mxu0 0.0
        %654 = vmatprep.subr.mxu0 0.0
        %655 = vmatpush1.msra.mxu0 0.0
        %656 = vmatprep.subr.mxu0 0.0
        %657 = vmatpush1.msra.mxu0 0.0
        %658 = vmatprep.subr.mxu0 0.0
        %659 = vmatpush1.msra.mxu0 0.0
        %660 = vmatprep.subr.mxu0 0.0
        %661 = vmatpush1.msra.mxu0 0.0
        %662 = vmatprep.subr.mxu0 0.0
        %663 = vmatpush1.msra.mxu0 0.0
        %664 = vmatprep.subr.mxu0 0.0
        %665 = vmatpush1.msra.mxu0 0.0
        %666 = vmatprep.subr.mxu0 0.0
        %667 = vmatpush1.msra.mxu0 0.0
        %668 = vmatprep.subr.mxu0 0.0
        %669 = vmatpush1.msra.mxu0 0.0
        %670 = vmatprep.subr.mxu0 0.0
        %671 = vmatpush1.msra.mxu0 0.0
        %672 = vmatprep.subr.mxu0 0.0
        %673 = vmatpush1.msra.mxu0 0.0
        %674 = vmatprep.subr.mxu0 0.0
        %675 = vmatpush1.msra.mxu0 0.0
        %676 = vmatprep.mubr.f32.mxu0 0.0
        %v677 = vand.u32 %v212, 4294901760
        %678 = vmatmul.mubr.f32.gmra.mrb[0].mxu0 %v677
        %v679 = vpop.f32.mrb[0].mxu0
        %v680 = vadd.f32 %v606, %v679
        %v681 = vpop.f32.mrb[0].mxu0
        %v682 = vadd.f32 %v608, %v681
        %683 = vdwg.mxu0
        %684 = vst [vmem:[%s188] sm:$0xff] %v680
        %685 = vst [vmem:[%s188 + $0x8] sm:$0xff] %v682
        %s686 = sand.u32 %s109, 1
        %s687 = scalar_lea.sflag [#allocation3], %s686
        %s688 = sand.u32 %s109, 1
        %s689 = smul.addr %s688, 16
        %s690 = scalar_lea.vmem [#allocation2], %s689
        // Predicated region
        $region33: #{tpu_custom_call.1} parent=31 // pred_check
          %p691 = pneg %p119
        $region34: #{tpu_custom_call.1} parent=31 // pred_check_branch
          %693 = sbr.rel (%p691) target = $region36
        $region35: #{tpu_custom_call.1} parent=31 // pred_region
          %s694 = smul.u32 2, %s22
          %s696 = ssub.s32 256, 256
          %697 = vsyncadd %s687, %s696
          %s698 = smul.addr %s21, 2
          %s699 = sadd.s32 %s694, %s698
          %s700 = smul.addr %s699, 128
          %s701 = scalar_lea.hbm %s3, %s700
          %s703 = sshll.u32 %s690, 4
          %s704 = int_to_ptr.vmem [resolvable:$true] %s703
          %706 = dma.vmem_to_hbm [thread:$0]  %s704, 256, %s701, %s687
        $region36: #{tpu_custom_call.1} parent=31 // pred_fallthru
          _
      $region32: #{tpu_custom_call.1} parent=5 // pred_fallthru
        _
      %p707 = scmp.le.s32.totalorder 2, %s12
      // Predicated region
      $region37: #{tpu_custom_call.1} parent=5 // pred_check
        %p708 = pneg %p707
      $region38: #{tpu_custom_call.1} parent=5 // pred_check_branch
        %710 = sbr.rel (%p708) target = $region40
      $region39: #{tpu_custom_call.1} parent=5 // pred_region
        %s711 = ssub.s32 %s12, 2
        // Predicated region
        $region41: #{tpu_custom_call.1} parent=39 // pred_check
          %p712 = pneg %p125
        $region42: #{tpu_custom_call.1} parent=39 // pred_check_branch
          %714 = sbr.rel (%p712) target = $region44
        $region43: #{tpu_custom_call.1} parent=39 // pred_region
          %s715 = sand.u32 %s110, 1
          %s716 = scalar_lea.sflag [#allocation3], %s715
          %s717 = sand.u32 %s110, 1
          %s718 = smul.addr %s717, 16
          %s719 = scalar_lea.vmem [#allocation2], %s718
          %720 = dma.done %s716, 256
        $region44: #{tpu_custom_call.1} parent=39 // pred_fallthru
          _
      $region40: #{tpu_custom_call.1} parent=5 // pred_fallthru
        _
    $region6: #{tpu_custom_call.1} parent=1 // loop_footer
      %s16 = sadd.s32 1, %s12
    $region7: #{tpu_custom_call.1} parent=1 // loop_footer_branch
      %11 = sbr.rel target = $region3
    $region8: #{tpu_custom_call.1} parent=1 // loop_exit
      _
    %721 = vsyncpa [#allocation3], 1
    %s722 = scalar_lea.sflag [#allocation3], 1
    %723 = vsyncpa %s722, 1

</llo_original>
